<compile_context>
chip_gen: v7x
topology: tpu7x:2x2x1
jax: 0.10.0
libtpu: 0.0.40
codegen_flags: <defaults>
</compile_context>

<pallas_src>
import functools

import jax
import jax.numpy as jnp
from jax import lax
from jax.experimental import pallas as pl
from jax.experimental.pallas import tpu as pltpu


def _round_up(x, m):
    return ((x + m - 1) // m) * m


def _bce_kernel(x_ref, t_ref, o_ref, acc_ref, *, n_rows, n_cols,
                bf16_transcendentals):
    i = pl.program_id(0)              # batch-tile axis ("parallel")
    j = pl.program_id(1)              # feature-tile axis ("arbitrary" reduction)
    tb, tn = x_ref.shape
    g = tb // 8                       # fold batch rows into groups of 8 sublanes

    @pl.when(j == 0)
    def _():
        acc_ref[...] = jnp.zeros_like(acc_ref)

    x = x_ref[...].astype(jnp.float32)                 # (tb, tn)
    t = t_ref[...].astype(jnp.float32)                 # (1, tn) -> broadcasts

    # Numerically stable BCE-with-logits (computed once, shared by branches).
    if bf16_transcendentals:
        # TODO(synk): enable by default on v7x only after the bundle dump
        # confirms the EUP-bound regime; changes low-order bits only.
        softplus = jnp.log1p(
            jnp.exp((-jnp.abs(x)).astype(jnp.bfloat16))).astype(jnp.float32)
    else:
        softplus = jnp.log1p(jnp.exp(-jnp.abs(x)))
    loss = jnp.maximum(x, 0.0) - x * t + softplus      # (tb, tn)

    need_row_mask = (n_rows % tb) != 0
    need_col_mask = (n_cols % tn) != 0

    def _accumulate(l2d):
        # (tb, tn) -> (g, 8, tn) splits the sublane-major dim (tn is a
        # 128-multiple, tb an 8-multiple): layout-preserving, no VMEM copy.
        acc_ref[...] += l2d.reshape(g, 8, tn).sum(axis=0)   # pure VPU adds

    if need_row_mask or need_col_mask:
        is_tail = jnp.bool_(False)
        if need_row_mask:
            is_tail = jnp.logical_or(is_tail, i == pl.num_programs(0) - 1)
        if need_col_mask:
            is_tail = jnp.logical_or(is_tail, j == pl.num_programs(1) - 1)

        @pl.when(jnp.logical_not(is_tail))
        def _():                      # interior: mask-free steady state
            _accumulate(loss)

        @pl.when(is_tail)
        def _():                      # tail: single select on the final loss
            mask = None
            if need_row_mask:
                row = i * tb + lax.broadcasted_iota(jnp.int32, (tb, tn), 0)
                mask = row < n_rows
            if need_col_mask:
                col = j * tn + lax.broadcasted_iota(jnp.int32, (tb, tn), 1)
                cmask = col < n_cols
                mask = cmask if mask is None else jnp.logical_and(mask, cmask)
            _accumulate(jnp.where(mask, loss, 0.0))
    else:
        _accumulate(loss)

    # One cross-lane/sublane reduce per batch tile, emitted as a partial sum.
    @pl.when(j == pl.num_programs(1) - 1)
    def _():
        o_ref[0, 0] = jnp.sum(acc_ref[...])


def bce_with_logits_mean(inputs, targets, *, tile_b=None, tile_n=None,
                         target_block_bytes=4 * 1024 * 1024, max_tile_n=4096,
                         bf16_transcendentals=False):
    """inputs: (B, N) logits (f32 or bf16); targets: (N,) labels replicated
    over the batch (as in the PyTorch module).  Returns the mean loss."""
    B, N = inputs.shape
    itemsize = jnp.dtype(inputs.dtype).itemsize
    sub = 16 if inputs.dtype == jnp.dtype(jnp.bfloat16) else 8

    # Contiguous-first tiling: full (128-padded) feature rows, then size the
    # batch dim of the block to hit ~target_block_bytes per grid step.
    if tile_n is None:
        tile_n = min(_round_up(N, 128), max_tile_n)
    else:
        tile_n = min(_round_up(tile_n, 128), _round_up(N, 128))
    if tile_b is None:
        rows = max(target_block_bytes // (tile_n * itemsize), sub)
        tile_b = max((rows // sub) * sub, sub)
    tile_b = min(_round_up(tile_b, sub), _round_up(B, sub))

    nb = pl.cdiv(B, tile_b)
    nj = pl.cdiv(N, tile_n)

    t_row = targets.reshape(1, N).astype(jnp.float32)   # no (8, N) HBM copy

    kernel = functools.partial(
        _bce_kernel, n_rows=B, n_cols=N,
        bf16_transcendentals=bf16_transcendentals)

    cost = pl.CostEstimate(
        flops=5 * B * N,
        transcendentals=2 * B * N,
        bytes_accessed=B * N * itemsize + 4 * N + 4 * nb)

    partials = pl.pallas_call(
        kernel,
        out_shape=jax.ShapeDtypeStruct((nb, 1), jnp.float32),
        grid_spec=pltpu.PrefetchScalarGridSpec(
            num_scalar_prefetch=0,
            grid=(nb, nj),
            in_specs=[
                pl.BlockSpec((tile_b, tile_n), lambda i, j: (i, j)),  # logits
                pl.BlockSpec((1, tile_n), lambda i, j: (0, j)),       # targets
            ],
            out_specs=pl.BlockSpec(
                (1, 1), lambda i, j: (i, 0), memory_space=pltpu.SMEM),
            scratch_shapes=[pltpu.VMEM((8, tile_n), jnp.float32)],
        ),
        compiler_params=pltpu.CompilerParams(
            dimension_semantics=("parallel", "arbitrary"),
            vmem_limit_bytes=32 * 1024 * 1024,
        ),
        cost_estimate=cost,
    )(inputs, t_row)

    return jnp.sum(partials) * (1.0 / (B * N))


def _reference(inputs, targets):
    B, N = inputs.shape
    t_full = jnp.broadcast_to(targets[None, :].astype(jnp.float32), (B, N))
    x = inputs.astype(jnp.float32)
    return jnp.mean(jnp.maximum(x, 0.0) - x * t_full
                    + jnp.log1p(jnp.exp(-jnp.abs(x))))


if __name__ == "__main__":
    key = jax.random.PRNGKey(0)
    k1, k2, k3, k4 = jax.random.split(key, 4)

    # Small case matching the module's spirit (breast-cancer: 30 features).
    B, N = 16, 30
    inputs = jax.random.normal(k1, (B, N), dtype=jnp.float32)            # logits
    targets = (jax.random.uniform(k2, (N,)) > 0.5).astype(jnp.float32)   # labels

    loss = jax.block_until_ready(bce_with_logits_mean(inputs, targets))
    ref = _reference(inputs, targets)
    assert jnp.allclose(loss, ref, atol=1e-5, rtol=1e-5), (loss, ref)

    # Multi-tile case: exercises accumulation across feature tiles, the
    # parallel batch axis, and both row/column tail paths (interior tiles
    # run mask-free).
    B2, N2 = 200, 700
    x2 = jax.random.normal(k3, (B2, N2), dtype=jnp.float32)
    t2 = (jax.random.uniform(k4, (N2,)) > 0.5).astype(jnp.float32)
    loss2 = jax.block_until_ready(
        bce_with_logits_mean(x2, t2, tile_b=64, tile_n=256))
    ref2 = _reference(x2, t2)
    assert jnp.allclose(loss2, ref2, atol=1e-5, rtol=1e-5), (loss2, ref2)

    print("KERNEL_OK")
</pallas_src>

<mosaic_0001>
module attributes {stable_mosaic.version = 11 : i64} {
  func.func @_bce_kernel(%arg0: i32, %arg1: i32, %arg2: memref<16x128xf32, #tpu.memory_space<vmem>>, %arg3: memref<1x128xf32, #tpu.memory_space<vmem>>, %arg4: memref<1x1xf32, #tpu.memory_space<smem>>, %arg5: memref<8x128xf32, #tpu.memory_space<vmem>>) attributes {dimension_semantics = [#tpu.dimension_semantics<parallel>, #tpu.dimension_semantics<arbitrary>], iteration_bounds = array<i64: 1, 1>, scalar_prefetch = 0 : i64, scratch_operands = 1 : i64, tpu.core_type = #tpu.core_type<tc>, window_params = [{transform_indices = @transform_0, window_bounds = array<i64: 16, 128>}, {transform_indices = @transform_1, window_bounds = array<i64: 1, 128>}, {transform_indices = @transform_2, window_bounds = array<i64: 1, 1>}]} {
    %c0_i32 = arith.constant 0 : i32
    %0 = arith.cmpi eq, %arg1, %c0_i32 : i32
    %1 = arith.extui %0 : i1 to i32
    %c0_i32_0 = arith.constant 0 : i32
    %2 = arith.cmpi ne, %1, %c0_i32_0 : i32
    scf.if %2 {
      %cst_10 = arith.constant 0.000000e+00 : f32
      %26 = vector.broadcast %cst_10 : f32 to vector<8x128xf32>
      %c0_11 = arith.constant 0 : index
      %c0_12 = arith.constant 0 : index
      %27 = vector.load %arg5[%c0_11, %c0_12] : memref<8x128xf32, #tpu.memory_space<vmem>>, vector<8x128xf32>
      tpu.vector_store %arg5[%c0_11, %c0_12], %26 {strides = array<i32>} : memref<8x128xf32, #tpu.memory_space<vmem>>, vector<8x128xf32>,
    } else {
    }
    %c0 = arith.constant 0 : index
    %c0_1 = arith.constant 0 : index
    %3 = vector.load %arg2[%c0, %c0_1] : memref<16x128xf32, #tpu.memory_space<vmem>>, vector<16x128xf32>
    %c0_2 = arith.constant 0 : index
    %c0_3 = arith.constant 0 : index
    %4 = vector.load %arg3[%c0_2, %c0_3] : memref<1x128xf32, #tpu.memory_space<vmem>>, vector<1x128xf32>
    %5 = math.absf %3 : vector<16x128xf32>
    %cst = arith.constant 0.000000e+00 : f32
    %6 = vector.broadcast %cst : f32 to vector<16x128xf32>
    %7 = arith.subf %6, %5 : vector<16x128xf32>
    %8 = math.exp %7 : vector<16x128xf32>
    %9 = math.log1p %8 : vector<16x128xf32>
    %cst_4 = arith.constant 0.000000e+00 : f32
    %10 = vector.broadcast %cst_4 : f32 to vector<16x128xf32>
    %11 = arith.maximumf %3, %10 : vector<16x128xf32>
    %12 = vector.broadcast %4 : vector<1x128xf32> to vector<16x128xf32>
    %13 = arith.mulf %3, %12 : vector<16x128xf32>
    %14 = arith.subf %11, %13 : vector<16x128xf32>
    %15 = arith.addf %14, %9 : vector<16x128xf32>
    %c0_i32_5 = arith.constant 0 : i32
    %16 = arith.cmpi eq, %arg1, %c0_i32_5 : i32
    %false = arith.constant false
    %17 = arith.ori %false, %16 : i1
    %true = arith.constant true
    %18 = arith.xori %17, %true : i1
    %19 = arith.extui %18 : i1 to i32
    %c0_i32_6 = arith.constant 0 : i32
    %20 = arith.cmpi ne, %19, %c0_i32_6 : i32
    scf.if %20 {
      %c0_10 = arith.constant 0 : index
      %c0_11 = arith.constant 0 : index
      %26 = vector.load %arg5[%c0_10, %c0_11] : memref<8x128xf32, #tpu.memory_space<vmem>>, vector<8x128xf32>
      %27 = vector.shape_cast %15 : vector<16x128xf32> to vector<2x8x128xf32>
      %cst_12 = arith.constant dense<0.000000e+00> : vector<8x128xf32>
      %28 = vector.multi_reduction <add>, %27, %cst_12 [0] : vector<2x8x128xf32> to vector<8x128xf32>
      %29 = arith.addf %26, %28 : vector<8x128xf32>
      %c0_13 = arith.constant 0 : index
      %c0_14 = arith.constant 0 : index
      %30 = vector.load %arg5[%c0_13, %c0_14] : memref<8x128xf32, #tpu.memory_space<vmem>>, vector<8x128xf32>
      tpu.vector_store %arg5[%c0_13, %c0_14], %29 {strides = array<i32>} : memref<8x128xf32, #tpu.memory_space<vmem>>, vector<8x128xf32>,
    } else {
    }
    %21 = arith.extui %17 : i1 to i32
    %c0_i32_7 = arith.constant 0 : i32
    %22 = arith.cmpi ne, %21, %c0_i32_7 : i32
    scf.if %22 {
      %c128_i32 = arith.constant 128 : i32
      %26 = arith.muli %arg1, %c128_i32 : i32
      %27 = tpu.iota {dimensions = array<i32: 1>} : vector<16x128xi32>
      %28 = vector.broadcast %26 : i32 to vector<16x128xi32>
      %29 = arith.addi %28, %27 : vector<16x128xi32>
      %c30_i32 = arith.constant 30 : i32
      %30 = vector.broadcast %c30_i32 : i32 to vector<16x128xi32>
      %31 = arith.cmpi slt, %29, %30 : vector<16x128xi32>
      %cst_10 = arith.constant 0.000000e+00 : f32
      %32 = vector.broadcast %cst_10 : f32 to vector<16x128xf32>
      %33 = arith.select %31, %15, %32 : vector<16x128xi1>, vector<16x128xf32>
      %c0_11 = arith.constant 0 : index
      %c0_12 = arith.constant 0 : index
      %34 = vector.load %arg5[%c0_11, %c0_12] : memref<8x128xf32, #tpu.memory_space<vmem>>, vector<8x128xf32>
      %35 = vector.shape_cast %33 : vector<16x128xf32> to vector<2x8x128xf32>
      %cst_13 = arith.constant dense<0.000000e+00> : vector<8x128xf32>
      %36 = vector.multi_reduction <add>, %35, %cst_13 [0] : vector<2x8x128xf32> to vector<8x128xf32>
      %37 = arith.addf %34, %36 : vector<8x128xf32>
      %c0_14 = arith.constant 0 : index
      %c0_15 = arith.constant 0 : index
      %38 = vector.load %arg5[%c0_14, %c0_15] : memref<8x128xf32, #tpu.memory_space<vmem>>, vector<8x128xf32>
      tpu.vector_store %arg5[%c0_14, %c0_15], %37 {strides = array<i32>} : memref<8x128xf32, #tpu.memory_space<vmem>>, vector<8x128xf32>,
    } else {
    }
    %c0_i32_8 = arith.constant 0 : i32
    %23 = arith.cmpi eq, %arg1, %c0_i32_8 : i32
    %24 = arith.extui %23 : i1 to i32
    %c0_i32_9 = arith.constant 0 : i32
    %25 = arith.cmpi ne, %24, %c0_i32_9 : i32
    scf.if %25 {
      %c0_10 = arith.constant 0 : index
      %c0_11 = arith.constant 0 : index
      %26 = vector.load %arg5[%c0_10, %c0_11] : memref<8x128xf32, #tpu.memory_space<vmem>>, vector<8x128xf32>
      %27 = vector.shape_cast %26 : vector<8x128xf32> to vector<1x8x128xf32>
      %cst_12 = arith.constant dense<0.000000e+00> : vector<1xf32>
      %28 = vector.multi_reduction <add>, %27, %cst_12 [1, 2] : vector<1x8x128xf32> to vector<1xf32>
      %29 = vector.shape_cast %28 : vector<1xf32> to vector<1x1x1xf32>
      %30 = vector.extract %29[0, 0, 0] : f32 from vector<1x1x1xf32>
      %c0_13 = arith.constant 0 : index
      %c0_14 = arith.constant 0 : index
      %31 = memref.load %arg4[%c0_13, %c0_14] : memref<1x1xf32, #tpu.memory_space<smem>>
      memref.store %30, %arg4[%c0_13, %c0_14] : memref<1x1xf32, #tpu.memory_space<smem>>
    } else {
    }
    return
  }
  func.func @transform_0(%arg0: i32, %arg1: i32) -> (i32, i32) {
    %c0_i32 = arith.constant 0 : i32
    return %arg0, %arg1 : i32, i32
  }
  func.func @transform_1(%arg0: i32, %arg1: i32) -> (i32, i32) {
    %c0_i32 = arith.constant 0 : i32
    %c0_i32_0 = arith.constant 0 : i32
    return %c0_i32, %arg1 : i32, i32
  }
  func.func @transform_2(%arg0: i32, %arg1: i32) -> (i32, i32) {
    %c0_i32 = arith.constant 0 : i32
    %c0_i32_0 = arith.constant 0 : i32
    return %arg0, %c0_i32 : i32, i32
  }
}

</mosaic_0001>

<llo_original>
// kernel: tpu_custom_call.1
$region0: #{tpu_custom_call.1}
  #allocation0 [shape = 'u32[]', space=smem, size = 0x4, offset = 0x4, fixed_abs, tag = 'smem constant byte address 0x4 - core index']
  #allocation1 [shape = 'u32[144,128]{1,0:T(1,128)}', space=vmem, size = 0x12000, scoped, tag = 'internal scratch']
  #allocation2 [shape = 'f32[8,128]{1,0:T(8,128)}', space=vmem, size = 0x1000, scoped, tag = 'scratch operand']
  %s0 = inlined_call_operand.hbm [shape: f32[16,30], index: 0, kind: input, shape index: {}]
  %s1 = inlined_call_operand.vmem [shape: f32[1,30], index: 1, kind: input, shape index: {}]
  %s2 = inlined_call_operand.hbm [shape: f32[1,1], index: 2, kind: output, shape index: {}]
  %s3 = sld [smem:[#allocation0]]
  $region34: #{tpu_custom_call.1} parent=0
    _
  %s5 = ssub.s32 1, %s3
  %s6 = scalar_select 0, %s5, %s3
  $region1: #{tpu_custom_call.1} parent=0
    #allocation3 [shape = 'u8[8192]{0}', space=vmem, size = 0x2000, scoped, tag = 'input window, operand 0, single buffered']
    #allocation4 [shape = 's32[1]{0}', space=sflag, size = 0x4, scoped, tag = 'scoped memory for tpu_custom_call.1']
    #allocation5 [shape = 's32[1]{0}', space=sflag, size = 0x4, scoped, tag = 'scoped memory for tpu_custom_call.1']
    #allocation6 [shape = 'u8[512]{0}', space=smem, size = 0x200, scoped, tag = 'output window, operand 0, single buffered']
    %7 = vsyncpa [#allocation4], 0
    %8 = vsyncpa [#allocation5], 0
    // Predicated region
    $region2: #{tpu_custom_call.1} parent=1 // pred_check
      _
    $region3: #{tpu_custom_call.1} parent=1 // pred_check_branch
      %10 = sbr.rel (0) target = $region5
    $region4: #{tpu_custom_call.1} parent=1 // pred_region
      %s12 = ssub.s32 256, 256
      %13 = vsyncadd [#allocation4], %s12
      %s14 = sshll.u32 [#allocation3], 4
      %s15 = int_to_ptr.vmem [resolvable:$true] %s14
      %20 = dma.hbm_to_vmem [thread:$0]  %s0, 256, %s15, [#allocation4], 128, 128, 8
    $region5: #{tpu_custom_call.1} parent=1 // pred_fallthru
      _
    // Predicated region
    $region6: #{tpu_custom_call.1} parent=1 // pred_check
      _
    $region7: #{tpu_custom_call.1} parent=1 // pred_check_branch
      %22 = sbr.rel (0) target = $region9
    $region8: #{tpu_custom_call.1} parent=1 // pred_region
      _
    $region9: #{tpu_custom_call.1} parent=1 // pred_fallthru
      _
    // Predicated region
    $region10: #{tpu_custom_call.1} parent=1 // pred_check
      _
    $region11: #{tpu_custom_call.1} parent=1 // pred_check_branch
      %24 = sbr.rel (0) target = $region13
    $region12: #{tpu_custom_call.1} parent=1 // pred_region
      %25 = dma.done [#allocation4], 256
    $region13: #{tpu_custom_call.1} parent=1 // pred_fallthru
      _
    %p26 = scmp.eq.s32.totalorder 0, 0
    // Predicated region
    $region14: #{tpu_custom_call.1} parent=1 // pred_check
      %p27 = pneg %p26
    $region15: #{tpu_custom_call.1} parent=1 // pred_check_branch
      %29 = sbr.rel (%p27) target = $region17
    $region16: #{tpu_custom_call.1} parent=1 // pred_region
      %30 = vst [vmem:[#allocation2] sm:$0xff] 0.0
    $region17: #{tpu_custom_call.1} parent=1 // pred_fallthru
      _
    %v31 = vld [vmem:[#allocation3] sm:$0xff]
    %v32 = vld [vmem:[#allocation3 + $0x8] sm:$0xff]
    %v33 = vld [vmem:[%s1] sm:$0x1]
    %v34 = vand.u32 2147483647, %v31
    %v35 = vand.u32 2147483647, %v32
    %v36 = vsub.f32 0.0, %v34
    %v37 = vsub.f32 0.0, %v35
    %v38 = vmul.f32 %v36, 1.442695
    %v39 = vpow.pop %v38
    %v40 = vmul.f32 %v37, 1.442695
    %v41 = vpow.pop %v40
    %v42 = vadd.f32 %v39, 1.0
    %v43 = vlog2.pop %v42
    %v44 = vmul.f32 %v43, 0.6931472
    %v45 = vmul.f32 -0.5, %v39
    %v46 = vadd.f32 %v45, 1.0
    %v47 = vmul.f32 %v46, %v39
    %v48 = vand.u32 2147483647, %v39
    %vm49 = vcmp.lt.f32.partialorder %v48, 0.0004427343
    %v50 = vsel %vm49, %v47, %v44
    %v51 = vadd.f32 %v41, 1.0
    %v52 = vlog2.pop %v51
    %v53 = vmul.f32 %v52, 0.6931472
    %v54 = vmul.f32 -0.5, %v41
    %v55 = vadd.f32 %v54, 1.0
    %v56 = vmul.f32 %v55, %v41
    %v57 = vand.u32 2147483647, %v41
    %vm58 = vcmp.lt.f32.partialorder %v57, 0.0004427343
    %v59 = vsel %vm58, %v56, %v53
    %v60 = vmax.f32 %v31, 0.0
    %v61 = vmax.f32 %v32, 0.0
    %v63 = vlaneseq
    %v64 = vshrl.u32 %v63, 7
    %v65 = vsub.s32 0, %v64
    %v66 = vrot.slane %v33, %v65
    %v68 = vmul.f32 %v31, %v66
    %v69 = vmul.f32 %v32, %v66
    %v70 = vsub.f32 %v60, %v68
    %v71 = vsub.f32 %v61, %v69
    %v72 = vadd.f32 %v70, %v50
    %v73 = vadd.f32 %v71, %v59
    %p74 = scmp.ne.s32.totalorder 0, 0
    // Predicated region
    $region18: #{tpu_custom_call.1} parent=1 // pred_check
      %p75 = pneg %p74
    $region19: #{tpu_custom_call.1} parent=1 // pred_check_branch
      %77 = sbr.rel (%p75) target = $region21
    $region20: #{tpu_custom_call.1} parent=1 // pred_region
      %v78 = vld [vmem:[#allocation2] sm:$0xff]
      %v79 = vadd.f32 %v72, %v73
      %v80 = vadd.f32 %v78, %v79
      %81 = vst [vmem:[#allocation2] sm:$0xff] %v80
    $region21: #{tpu_custom_call.1} parent=1 // pred_fallthru
      _
    // Predicated region
    $region22: #{tpu_custom_call.1} parent=1 // pred_check
      %p82 = pneg %p26
    $region23: #{tpu_custom_call.1} parent=1 // pred_check_branch
      %84 = sbr.rel (%p82) target = $region25
    $region24: #{tpu_custom_call.1} parent=1 // pred_region
      %s85 = smul.u32 0, 128
      %v86 = vlaneseq
      %v87 = vand.u32 %v86, 127
      %v88 = vstv %s85
      %v89 = vadd.s32 %v88, %v87
      %vm90 = vcmp.lt.s32.totalorder %v89, 30
      %v91 = vsel %vm90, %v72, 0.0
      %v92 = vsel %vm90, %v73, 0.0
      %v93 = vld [vmem:[#allocation2] sm:$0xff]
      %v94 = vadd.f32 %v91, %v92
      %v95 = vadd.f32 %v93, %v94
      %96 = vst [vmem:[#allocation2] sm:$0xff] %v95
      %v97 = vld [vmem:[#allocation2] sm:$0xff]
      %98 = vadd.xlane.f32.xlu0 %v97
      %v99 = vpop.xlane.xlu0 %98
      %v100 = vrot.slane %v99, 4
      %v101 = vadd.f32 %v99, %v100
      %v102 = vrot.slane %v101, 2
      %v103 = vadd.f32 %v101, %v102
      %v104 = vrot.slane %v103, 1
      %v105 = vadd.f32 %v103, %v104
      %s106 = vtos %v105
      %s107 = scalar_lea.smem [#allocation6], 0
      %108 = sst [smem:[%s107]] %s106
    $region25: #{tpu_custom_call.1} parent=1 // pred_fallthru
      _
    // Predicated region
    $region26: #{tpu_custom_call.1} parent=1 // pred_check
      _
    $region27: #{tpu_custom_call.1} parent=1 // pred_check_branch
      %110 = sbr.rel (0) target = $region29
    $region28: #{tpu_custom_call.1} parent=1 // pred_region
      %s112 = ssub.s32 16, 16
      %113 = vsyncadd [#allocation5], %s112
      %116 = dma.smem_to_hbm [#allocation6], 16, %s2, [#allocation5]
    $region29: #{tpu_custom_call.1} parent=1 // pred_fallthru
      _
    // Predicated region
    $region30: #{tpu_custom_call.1} parent=1 // pred_check
      _
    $region31: #{tpu_custom_call.1} parent=1 // pred_check_branch
      %118 = sbr.rel (0) target = $region33
    $region32: #{tpu_custom_call.1} parent=1 // pred_region
      %119 = dma.done [#allocation5], 16
    $region33: #{tpu_custom_call.1} parent=1 // pred_fallthru
      _
    %120 = sfence
    %121 = vsyncpa [#allocation4], 1
    %122 = vsyncpa [#allocation5], 1

</llo_original>
